<compile_context>
chip_gen: v7x
topology: tpu7x:2x2x1
jax: 0.10.0
libtpu: 0.0.40
codegen_flags: <defaults>
</compile_context>

<pallas_src>
import functools

import jax
import jax.numpy as jnp
from jax.experimental import pallas as pl
from jax.experimental.pallas import tpu as pltpu


def _round_up(a: int, m: int) -> int:
    return ((a + m - 1) // m) * m


def _transformer_kernel(x_ref, w1_ref, b1_ref, w2_ref, b2_ref, g_ref, bt_ref,
                        o_ref, *, depth: int, d_valid: int):
    tile_b, d_pad = x_ref.shape
    h_pad = w1_ref.shape[1]

    x = x_ref[...]                       # (TILE_B, D_pad) f32; padded lanes are 0
    w1 = w1_ref[...]                     # (D_pad, H_pad) bf16
    w2 = w2_ref[...]                     # (H_pad, D_pad) bf16

    # Hoist broadcasts out of the depth loop (JAX does not CSE broadcast_in_dim).
    b1 = jnp.broadcast_to(b1_ref[...], (tile_b, h_pad))
    b2 = jnp.broadcast_to(b2_ref[...], (tile_b, d_pad))
    gamma = jnp.broadcast_to(g_ref[...], (tile_b, d_pad))
    beta = jnp.broadcast_to(bt_ref[...], (tile_b, d_pad))

    # Lane-validity mask for the LayerNorm variance: padded lanes of y are
    # exactly 0, but (y - mu) is not, so mask before squaring. Only needed
    # when the feature dim was actually padded; hoisted out of the loop.
    if d_valid != d_pad:
        lane = jax.lax.broadcasted_iota(jnp.int32, (1, d_pad), 1)
        mask = jnp.broadcast_to((lane < d_valid).astype(jnp.float32),
                                (tile_b, d_pad))
    else:
        mask = None
    inv_d = 1.0 / float(d_valid)

    def block(xv):
        # hypotheses_net: Linear -> ReLU -> Linear (bf16 MXU inputs, f32 acc)
        h = jnp.dot(xv.astype(jnp.bfloat16), w1,
                    preferred_element_type=jnp.float32) + b1
        h = jnp.maximum(h, 0.0)
        a = jnp.dot(h.astype(jnp.bfloat16), w2,
                    preferred_element_type=jnp.float32) + b2
        # residual + LayerNorm over the valid feature lanes (eps = 1e-5)
        y = a + xv                                        # padded lanes stay 0
        mu = jnp.sum(y, axis=-1, keepdims=True) * inv_d
        yc = y - mu                                       # reuse centered y
        ycm = yc if mask is None else yc * mask
        var = jnp.sum(ycm * ycm, axis=-1, keepdims=True) * inv_d
        # gamma/beta are 0 on padded lanes -> result stays 0 there.
        return yc * jax.lax.rsqrt(var + 1e-5) * gamma + beta

    # Same weights each step == Sequential(*[block] * depth) weight sharing.
    if depth <= 8:
        for _ in range(depth):
            x = block(x)
    else:
        x = jax.lax.fori_loop(0, depth, lambda _, xv: block(xv), x, unroll=2)

    o_ref[...] = jax.nn.sigmoid(x).astype(o_ref.dtype)


def transformer_forward(x, params, *, depth: int, tile_b: int = 128):
    """x: (B, D) float32. params: dict of weights (shared across all depth steps)."""
    w1, b1, w2, b2, gamma, beta = (params["w1"], params["b1"], params["w2"],
                                   params["b2"], params["gamma"], params["beta"])
    B, D = x.shape
    H = w1.shape[1]

    d_pad = _round_up(D, 128)            # lane-dense last dim (unmasked vst)
    h_pad = _round_up(H, 128)
    tile_b = _round_up(max(8, min(tile_b, B)), 8)
    b_pad = _round_up(B, tile_b)

    f32, bf16 = jnp.float32, jnp.bfloat16
    xp = jnp.zeros((b_pad, d_pad), f32).at[:B, :D].set(x.astype(f32))
    w1p = jnp.zeros((d_pad, h_pad), bf16).at[:D, :H].set(w1.astype(bf16))
    b1p = jnp.zeros((1, h_pad), f32).at[:, :H].set(b1.astype(f32))
    w2p = jnp.zeros((h_pad, d_pad), bf16).at[:H, :D].set(w2.astype(bf16))
    b2p = jnp.zeros((1, d_pad), f32).at[:, :D].set(b2.astype(f32))
    gp = jnp.zeros((1, d_pad), f32).at[:, :D].set(gamma.astype(f32))
    btp = jnp.zeros((1, d_pad), f32).at[:, :D].set(beta.astype(f32))

    grid = (b_pad // tile_b,)
    kernel = functools.partial(_transformer_kernel, depth=depth, d_valid=D)

    cost = pl.CostEstimate(
        flops=4 * depth * b_pad * d_pad * h_pad,
        transcendentals=b_pad * d_pad + depth * b_pad,
        bytes_accessed=(2 * b_pad * d_pad * 4                    # x in + out
                        + (w1p.size + w2p.size) * 2              # bf16 weights
                        + (b1p.size + b2p.size + gp.size + btp.size) * 4))

    act_spec = pl.BlockSpec((tile_b, d_pad), lambda i: (i, 0))
    # Shared weights: same block every grid step -> stay resident in VMEM.
    res = lambda shape: pl.BlockSpec(shape, lambda i: (0, 0))

    out = pl.pallas_call(
        kernel,
        out_shape=jax.ShapeDtypeStruct((b_pad, d_pad), f32),
        grid=grid,
        in_specs=[act_spec,
                  res((d_pad, h_pad)), res((1, h_pad)),
                  res((h_pad, d_pad)), res((1, d_pad)),
                  res((1, d_pad)), res((1, d_pad))],
        out_specs=act_spec,
        compiler_params=pltpu.CompilerParams(
            dimension_semantics=("parallel",)),   # megacore sharding on v7x
        cost_estimate=cost,
    )(xp, w1p, b1p, w2p, b2p, gp, btp)
    return out[:B, :D]


def init_params(key, n_input: int, width: int):
    """Deterministic init mimicking PyTorch Linear default (uniform +/- 1/sqrt(fan_in))."""
    H = n_input * width
    k1, k2, k3, k4 = jax.random.split(key, 4)
    lim1 = 1.0 / jnp.sqrt(jnp.float32(n_input))
    lim2 = 1.0 / jnp.sqrt(jnp.float32(H))
    return {
        # stored already transposed to (in, out) for x @ W
        "w1": jax.random.uniform(k1, (n_input, H), jnp.float32, -lim1, lim1),
        "b1": jax.random.uniform(k2, (1, H), jnp.float32, -lim1, lim1),
        "w2": jax.random.uniform(k3, (H, n_input), jnp.float32, -lim2, lim2),
        "b2": jax.random.uniform(k4, (1, n_input), jnp.float32, -lim2, lim2),
        "gamma": jnp.ones((1, n_input), jnp.float32),   # LayerNorm weight
        "beta": jnp.zeros((1, n_input), jnp.float32),   # LayerNorm bias
    }


def _reference(x, p, depth):
    # Plain-JAX reference matching the kernel's numerics (bf16 MXU inputs,
    # f32 accumulation, f32 LayerNorm / sigmoid).
    w1b = p["w1"].astype(jnp.bfloat16)
    w2b = p["w2"].astype(jnp.bfloat16)
    for _ in range(depth):
        h = jnp.dot(x.astype(jnp.bfloat16), w1b,
                    preferred_element_type=jnp.float32) + p["b1"]
        h = jnp.maximum(h, 0.0)
        a = jnp.dot(h.astype(jnp.bfloat16), w2b,
                    preferred_element_type=jnp.float32) + p["b2"]
        y = a + x
        mu = jnp.mean(y, axis=-1, keepdims=True)
        yc = y - mu
        var = jnp.mean(yc * yc, axis=-1, keepdims=True)
        x = yc * jax.lax.rsqrt(var + 1e-5) * p["gamma"] + p["beta"]
    return jax.nn.sigmoid(x)


if __name__ == "__main__":
    n_input, depth, width = 32, 2, 4      # hidden = n_input * width = 128
    batch = 20                            # exercises batch padding + a 2-step grid

    key = jax.random.PRNGKey(0)
    kx, kp = jax.random.split(key)
    x = jax.random.normal(kx, (batch, n_input), jnp.float32)
    params = init_params(kp, n_input, width)

    out = transformer_forward(x, params, depth=depth, tile_b=16)
    out = jax.block_until_ready(out)

    ref = _reference(x, params, depth)
    assert out.shape == (batch, n_input)
    assert jnp.allclose(out, ref, atol=2e-3, rtol=2e-3), \
        float(jnp.max(jnp.abs(out - ref)))

    print("KERNEL_OK")
</pallas_src>

<mosaic_0001>
module attributes {stable_mosaic.version = 11 : i64} {
  func.func @_transformer_kernel(%arg0: i32, %arg1: memref<16x128xf32, #tpu.memory_space<vmem>>, %arg2: memref<128x128xbf16, #tpu.memory_space<vmem>>, %arg3: memref<1x128xf32, #tpu.memory_space<vmem>>, %arg4: memref<128x128xbf16, #tpu.memory_space<vmem>>, %arg5: memref<1x128xf32, #tpu.memory_space<vmem>>, %arg6: memref<1x128xf32, #tpu.memory_space<vmem>>, %arg7: memref<1x128xf32, #tpu.memory_space<vmem>>, %arg8: memref<16x128xf32, #tpu.memory_space<vmem>>) attributes {dimension_semantics = [#tpu.dimension_semantics<parallel>], iteration_bounds = array<i64: 2>, scalar_prefetch = 0 : i64, scratch_operands = 0 : i64, tpu.core_type = #tpu.core_type<tc>, window_params = [{transform_indices = @transform_0, window_bounds = array<i64: 16, 128>}, {pipeline_mode = #tpu.pipeline_mode<synchronous>, transform_indices = @transform_1, window_bounds = array<i64: 128, 128>}, {pipeline_mode = #tpu.pipeline_mode<synchronous>, transform_indices = @transform_2, window_bounds = array<i64: 1, 128>}, {pipeline_mode = #tpu.pipeline_mode<synchronous>, transform_indices = @transform_3, window_bounds = array<i64: 128, 128>}, {pipeline_mode = #tpu.pipeline_mode<synchronous>, transform_indices = @transform_4, window_bounds = array<i64: 1, 128>}, {pipeline_mode = #tpu.pipeline_mode<synchronous>, transform_indices = @transform_5, window_bounds = array<i64: 1, 128>}, {pipeline_mode = #tpu.pipeline_mode<synchronous>, transform_indices = @transform_6, window_bounds = array<i64: 1, 128>}, {transform_indices = @transform_7, window_bounds = array<i64: 16, 128>}]} {
    %c0 = arith.constant 0 : index
    %c0_0 = arith.constant 0 : index
    %0 = vector.load %arg1[%c0, %c0_0] : memref<16x128xf32, #tpu.memory_space<vmem>>, vector<16x128xf32>
    %c0_1 = arith.constant 0 : index
    %c0_2 = arith.constant 0 : index
    %1 = vector.load %arg2[%c0_1, %c0_2] : memref<128x128xbf16, #tpu.memory_space<vmem>>, vector<128x128xbf16>
    %c0_3 = arith.constant 0 : index
    %c0_4 = arith.constant 0 : index
    %2 = vector.load %arg4[%c0_3, %c0_4] : memref<128x128xbf16, #tpu.memory_space<vmem>>, vector<128x128xbf16>
    %c0_5 = arith.constant 0 : index
    %c0_6 = arith.constant 0 : index
    %3 = vector.load %arg3[%c0_5, %c0_6] : memref<1x128xf32, #tpu.memory_space<vmem>>, vector<1x128xf32>
    %4 = vector.shape_cast %3 : vector<1x128xf32> to vector<1x128xf32>
    %5 = vector.broadcast %4 : vector<1x128xf32> to vector<16x128xf32>
    %c0_7 = arith.constant 0 : index
    %c0_8 = arith.constant 0 : index
    %6 = vector.load %arg5[%c0_7, %c0_8] : memref<1x128xf32, #tpu.memory_space<vmem>>, vector<1x128xf32>
    %7 = vector.shape_cast %6 : vector<1x128xf32> to vector<1x128xf32>
    %8 = vector.broadcast %7 : vector<1x128xf32> to vector<16x128xf32>
    %c0_9 = arith.constant 0 : index
    %c0_10 = arith.constant 0 : index
    %9 = vector.load %arg6[%c0_9, %c0_10] : memref<1x128xf32, #tpu.memory_space<vmem>>, vector<1x128xf32>
    %10 = vector.shape_cast %9 : vector<1x128xf32> to vector<1x128xf32>
    %11 = vector.broadcast %10 : vector<1x128xf32> to vector<16x128xf32>
    %c0_11 = arith.constant 0 : index
    %c0_12 = arith.constant 0 : index
    %12 = vector.load %arg7[%c0_11, %c0_12] : memref<1x128xf32, #tpu.memory_space<vmem>>, vector<1x128xf32>
    %13 = vector.shape_cast %12 : vector<1x128xf32> to vector<1x128xf32>
    %14 = vector.broadcast %13 : vector<1x128xf32> to vector<16x128xf32>
    %15 = tpu.iota {dimensions = array<i32: 1>} : vector<1x128xi32>
    %c32_i32 = arith.constant 32 : i32
    %16 = vector.broadcast %c32_i32 : i32 to vector<1x128xi32>
    %17 = arith.cmpi slt, %15, %16 : vector<1x128xi32>
    %18 = arith.extui %17 : vector<1x128xi1> to vector<1x128xi32>
    %19 = arith.sitofp %18 : vector<1x128xi32> to vector<1x128xf32>
    %20 = vector.shape_cast %19 : vector<1x128xf32> to vector<1x128xf32>
    %21 = vector.broadcast %20 : vector<1x128xf32> to vector<16x128xf32>
    %22 = arith.truncf %0 : vector<16x128xf32> to vector<16x128xbf16>
    %cst = arith.constant dense<0.000000e+00> : vector<16x128xf32>
    %23 = tpu.matmul %22, %1, %cst {dimension_numbers = #tpu.dot_dimension_numbers<[1], [0], [0], [1], [0, 0, 1, 1], [], []>} : vector<16x128xbf16>, vector<128x128xbf16>, vector<16x128xf32> -> vector<16x128xf32>
    %24 = arith.addf %23, %5 : vector<16x128xf32>
    %cst_13 = arith.constant 0.000000e+00 : f32
    %25 = vector.broadcast %cst_13 : f32 to vector<16x128xf32>
    %26 = arith.maximumf %24, %25 : vector<16x128xf32>
    %27 = arith.truncf %26 : vector<16x128xf32> to vector<16x128xbf16>
    %cst_14 = arith.constant dense<0.000000e+00> : vector<16x128xf32>
    %28 = tpu.matmul %27, %2, %cst_14 {dimension_numbers = #tpu.dot_dimension_numbers<[1], [0], [0], [1], [0, 0, 1, 1], [], []>} : vector<16x128xbf16>, vector<128x128xbf16>, vector<16x128xf32> -> vector<16x128xf32>
    %29 = arith.addf %28, %8 : vector<16x128xf32>
    %30 = arith.addf %29, %0 : vector<16x128xf32>
    %cst_15 = arith.constant dense<0.000000e+00> : vector<16xf32>
    %31 = vector.multi_reduction <add>, %30, %cst_15 [1] : vector<16x128xf32> to vector<16xf32>
    %32 = vector.shape_cast %31 : vector<16xf32> to vector<16x1xf32>
    %cst_16 = arith.constant 3.125000e-02 : f32
    %33 = vector.broadcast %cst_16 : f32 to vector<16x1xf32>
    %34 = arith.mulf %32, %33 : vector<16x1xf32>
    %35 = vector.broadcast %34 : vector<16x1xf32> to vector<16x128xf32>
    %36 = arith.subf %30, %35 : vector<16x128xf32>
    %37 = arith.mulf %36, %21 : vector<16x128xf32>
    %38 = arith.mulf %37, %37 : vector<16x128xf32>
    %cst_17 = arith.constant dense<0.000000e+00> : vector<16xf32>
    %39 = vector.multi_reduction <add>, %38, %cst_17 [1] : vector<16x128xf32> to vector<16xf32>
    %40 = vector.shape_cast %39 : vector<16xf32> to vector<16x1xf32>
    %cst_18 = arith.constant 3.125000e-02 : f32
    %41 = vector.broadcast %cst_18 : f32 to vector<16x1xf32>
    %42 = arith.mulf %40, %41 : vector<16x1xf32>
    %cst_19 = arith.constant 9.99999974E-6 : f32
    %43 = vector.broadcast %cst_19 : f32 to vector<16x1xf32>
    %44 = arith.addf %42, %43 : vector<16x1xf32>
    %45 = math.rsqrt %44 : vector<16x1xf32>
    %46 = vector.broadcast %45 : vector<16x1xf32> to vector<16x128xf32>
    %47 = arith.mulf %36, %46 : vector<16x128xf32>
    %48 = arith.mulf %47, %11 : vector<16x128xf32>
    %49 = arith.addf %48, %14 : vector<16x128xf32>
    %50 = arith.truncf %49 : vector<16x128xf32> to vector<16x128xbf16>
    %cst_20 = arith.constant dense<0.000000e+00> : vector<16x128xf32>
    %51 = tpu.matmul %50, %1, %cst_20 {dimension_numbers = #tpu.dot_dimension_numbers<[1], [0], [0], [1], [0, 0, 1, 1], [], []>} : vector<16x128xbf16>, vector<128x128xbf16>, vector<16x128xf32> -> vector<16x128xf32>
    %52 = arith.addf %51, %5 : vector<16x128xf32>
    %cst_21 = arith.constant 0.000000e+00 : f32
    %53 = vector.broadcast %cst_21 : f32 to vector<16x128xf32>
    %54 = arith.maximumf %52, %53 : vector<16x128xf32>
    %55 = arith.truncf %54 : vector<16x128xf32> to vector<16x128xbf16>
    %cst_22 = arith.constant dense<0.000000e+00> : vector<16x128xf32>
    %56 = tpu.matmul %55, %2, %cst_22 {dimension_numbers = #tpu.dot_dimension_numbers<[1], [0], [0], [1], [0, 0, 1, 1], [], []>} : vector<16x128xbf16>, vector<128x128xbf16>, vector<16x128xf32> -> vector<16x128xf32>
    %57 = arith.addf %56, %8 : vector<16x128xf32>
    %58 = arith.addf %57, %49 : vector<16x128xf32>
    %cst_23 = arith.constant dense<0.000000e+00> : vector<16xf32>
    %59 = vector.multi_reduction <add>, %58, %cst_23 [1] : vector<16x128xf32> to vector<16xf32>
    %60 = vector.shape_cast %59 : vector<16xf32> to vector<16x1xf32>
    %cst_24 = arith.constant 3.125000e-02 : f32
    %61 = vector.broadcast %cst_24 : f32 to vector<16x1xf32>
    %62 = arith.mulf %60, %61 : vector<16x1xf32>
    %63 = vector.broadcast %62 : vector<16x1xf32> to vector<16x128xf32>
    %64 = arith.subf %58, %63 : vector<16x128xf32>
    %65 = arith.mulf %64, %21 : vector<16x128xf32>
    %66 = arith.mulf %65, %65 : vector<16x128xf32>
    %cst_25 = arith.constant dense<0.000000e+00> : vector<16xf32>
    %67 = vector.multi_reduction <add>, %66, %cst_25 [1] : vector<16x128xf32> to vector<16xf32>
    %68 = vector.shape_cast %67 : vector<16xf32> to vector<16x1xf32>
    %cst_26 = arith.constant 3.125000e-02 : f32
    %69 = vector.broadcast %cst_26 : f32 to vector<16x1xf32>
    %70 = arith.mulf %68, %69 : vector<16x1xf32>
    %cst_27 = arith.constant 9.99999974E-6 : f32
    %71 = vector.broadcast %cst_27 : f32 to vector<16x1xf32>
    %72 = arith.addf %70, %71 : vector<16x1xf32>
    %73 = math.rsqrt %72 : vector<16x1xf32>
    %74 = vector.broadcast %73 : vector<16x1xf32> to vector<16x128xf32>
    %75 = arith.mulf %64, %74 : vector<16x128xf32>
    %76 = arith.mulf %75, %11 : vector<16x128xf32>
    %77 = arith.addf %76, %14 : vector<16x128xf32>
    %78 = arith.negf %77 : vector<16x128xf32>
    %79 = math.exp %78 : vector<16x128xf32>
    %cst_28 = arith.constant 1.000000e+00 : f32
    %80 = vector.broadcast %cst_28 : f32 to vector<16x128xf32>
    %81 = arith.addf %80, %79 : vector<16x128xf32>
    %82 = arith.divf %80, %81 : vector<16x128xf32>
    %c0_29 = arith.constant 0 : index
    %c0_30 = arith.constant 0 : index
    %83 = vector.load %arg8[%c0_29, %c0_30] : memref<16x128xf32, #tpu.memory_space<vmem>>, vector<16x128xf32>
    tpu.vector_store %arg8[%c0_29, %c0_30], %82 {strides = array<i32>} : memref<16x128xf32, #tpu.memory_space<vmem>>, vector<16x128xf32>,
    return
  }
  func.func @transform_0(%arg0: i32) -> (i32, i32) {
    %c0_i32 = arith.constant 0 : i32
    %c0_i32_0 = arith.constant 0 : i32
    return %arg0, %c0_i32 : i32, i32
  }
  func.func @transform_1(%arg0: i32) -> (i32, i32) {
    %c0_i32 = arith.constant 0 : i32
    %c0_i32_0 = arith.constant 0 : i32
    %c0_i32_1 = arith.constant 0 : i32
    return %c0_i32, %c0_i32_0 : i32, i32
  }
  func.func @transform_2(%arg0: i32) -> (i32, i32) {
    %c0_i32 = arith.constant 0 : i32
    %c0_i32_0 = arith.constant 0 : i32
    %c0_i32_1 = arith.constant 0 : i32
    return %c0_i32, %c0_i32_0 : i32, i32
  }
  func.func @transform_3(%arg0: i32) -> (i32, i32) {
    %c0_i32 = arith.constant 0 : i32
    %c0_i32_0 = arith.constant 0 : i32
    %c0_i32_1 = arith.constant 0 : i32
    return %c0_i32, %c0_i32_0 : i32, i32
  }
  func.func @transform_4(%arg0: i32) -> (i32, i32) {
    %c0_i32 = arith.constant 0 : i32
    %c0_i32_0 = arith.constant 0 : i32
    %c0_i32_1 = arith.constant 0 : i32
    return %c0_i32, %c0_i32_0 : i32, i32
  }
  func.func @transform_5(%arg0: i32) -> (i32, i32) {
    %c0_i32 = arith.constant 0 : i32
    %c0_i32_0 = arith.constant 0 : i32
    %c0_i32_1 = arith.constant 0 : i32
    return %c0_i32, %c0_i32_0 : i32, i32
  }
  func.func @transform_6(%arg0: i32) -> (i32, i32) {
    %c0_i32 = arith.constant 0 : i32
    %c0_i32_0 = arith.constant 0 : i32
    %c0_i32_1 = arith.constant 0 : i32
    return %c0_i32, %c0_i32_0 : i32, i32
  }
  func.func @transform_7(%arg0: i32) -> (i32, i32) {
    %c0_i32 = arith.constant 0 : i32
    %c0_i32_0 = arith.constant 0 : i32
    return %arg0, %c0_i32 : i32, i32
  }
}

</mosaic_0001>

<llo_original>
// kernel: tpu_custom_call.1
$region0: #{tpu_custom_call.1}
  #allocation0 [shape = 'u32[]', space=smem, size = 0x4, offset = 0x4, fixed_abs, tag = 'smem constant byte address 0x4 - core index']
  #allocation1 [shape = 'u32[144,128]{1,0:T(1,128)}', space=vmem, size = 0x12000, scoped, tag = 'internal scratch']
  %s0 = inlined_call_operand.hbm [shape: f32[32,128], index: 0, kind: input, shape index: {}]
  %s1 = inlined_call_operand.hbm [shape: bf16[128,128], index: 1, kind: input, shape index: {}]
  %s2 = inlined_call_operand.vmem [shape: f32[1,128], index: 2, kind: input, shape index: {}]
  %s3 = inlined_call_operand.hbm [shape: bf16[128,128], index: 3, kind: input, shape index: {}]
  %s4 = inlined_call_operand.vmem [shape: f32[1,128], index: 4, kind: input, shape index: {}]
  %s5 = inlined_call_operand.vmem [shape: f32[1,128], index: 5, kind: input, shape index: {}]
  %s6 = inlined_call_operand.vmem [shape: f32[1,128], index: 6, kind: input, shape index: {}]
  %s7 = inlined_call_operand.hbm [shape: f32[32,128], index: 7, kind: output, shape index: {}]
  %s8 = sld [smem:[#allocation0]]
  $region73: #{tpu_custom_call.1} parent=0
    _
  %s10 = ssub.s32 1, %s8
  %s11 = scalar_select 0, %s10, %s8
  $region1: #{tpu_custom_call.1} parent=0
    #allocation2 [shape = 'u8[16384]{0}', space=vmem, size = 0x4000, scoped, tag = 'input window, operand 0']
    #allocation3 [shape = 's32[2]{0}', space=sflag, size = 0x8, scoped, tag = 'scoped memory for tpu_custom_call.1']
    #allocation4 [shape = 's32[2]{0}', space=sflag, size = 0x8, scoped, tag = 'scoped memory for tpu_custom_call.1']
    #allocation5 [shape = 'u8[32768]{0}', space=vmem, size = 0x8000, scoped, tag = 'input window, operand 1, single buffered']
    #allocation6 [shape = 's32[1]{0}', space=sflag, size = 0x4, scoped, tag = 'scoped memory for tpu_custom_call.1']
    #allocation7 [shape = 'u8[32768]{0}', space=vmem, size = 0x8000, scoped, tag = 'input window, operand 3, single buffered']
    #allocation8 [shape = 'u8[16384]{0}', space=vmem, size = 0x4000, scoped, tag = 'output window, operand 0']
    %12 = vsyncpa [#allocation3], 0
    %s13 = scalar_lea.sflag [#allocation3], 1
    %14 = vsyncpa %s13, 0
    %15 = vsyncpa [#allocation6], 0
    %16 = vsyncpa [#allocation4], 0
    %s17 = scalar_lea.sflag [#allocation4], 1
    %18 = vsyncpa %s17, 0
    loop: start=0, step=1, limit=4
    $region2: #{tpu_custom_call.1} parent=1 // loop_pre_header
      _
    $region3: #{tpu_custom_call.1} parent=1 // loop_header
      %s20 = sphi 0, %s24
      %p21 = scmp.ge.s32.totalorder %s20, 4
      %s30 = sphi 0, %s32
      %s33 = sphi 0, %s30
      %s34 = sphi 0, %s33
      %s50 = sphi 0, %s34
      %s54 = sphi 0, %s54
      %s56 = sphi 0, %s54
      %s57 = sphi 0, %s56
      %s71 = sphi 0, %s57
      %s75 = sphi 0, %s75
      %s77 = sphi 0, %s75
      %s78 = sphi 0, %s77
      %s92 = sphi 0, %s78
      %s96 = sphi 0, %s96
      %s98 = sphi 0, %s96
      %s99 = sphi 0, %s98
      %s113 = sphi 0, %s99
      %s117 = sphi 0, %s117
      %s119 = sphi 0, %s117
      %s120 = sphi 0, %s119
      %s134 = sphi 0, %s120
      %s138 = sphi 0, %s138
      %s140 = sphi 0, %s138
      %s141 = sphi 0, %s140
      %s155 = sphi 0, %s141
      %s159 = sphi 0, %s159
      %s161 = sphi 0, %s159
      %s162 = sphi 0, %s161
      %s176 = sphi 0, %s162
      %s182 = sphi 0, %s184
      %s185 = sphi 0, %s182
      %s186 = sphi 0, %s185
      %s202 = sphi 0, %s186
    $region4: #{tpu_custom_call.1} parent=1 // loop_header_branch
      %23 = sbr.rel (%p21) target = $region8
    $region5: #{tpu_custom_call.1} parent=1 // loop_body
      %s25 = ssub.s32 %s20, 1
      %s26 = ssub.s32 %s20, 2
      %s27 = sadd.s32 %s20, 1
      %s28 = ssub.s32 %s20, %s27
      %p29 = scmp.eq.s32.totalorder %s28, 0
      %s31 = sadd.s32 %s30, 1
      %s32 = scalar_select %p29, %s30, %s31
      %p35 = pneg %p29
      %p36 = scmp.eq.s32.totalorder %s20, 1
      %p37 = por %p35, %p36
      %p38 = scmp.ne.s32.totalorder %s30, %s33
      %p39 = scmp.eq.s32.totalorder %s20, 0
      %p40 = por %p38, %p39
      %p41 = scmp.ne.s32.totalorder %s30, %s33
      %p42 = scmp.eq.s32.totalorder %s25, 1
      %p43 = por %p41, %p42
      %p44 = scmp.ne.s32.totalorder %s33, %s34
      %p45 = scmp.eq.s32.totalorder %s25, 0
      %p46 = por %p44, %p45
      %p47 = scmp.ne.s32.totalorder %s33, %s34
      %p48 = scmp.eq.s32.totalorder %s26, 1
      %p49 = por %p47, %p48
      %p51 = scmp.ne.s32.totalorder %s34, %s50
      %p52 = scmp.eq.s32.totalorder %s26, 0
      %p53 = por %p51, %p52
      %s55 = sadd.s32 %s54, 1
      %p58 = scmp.eq.s32.totalorder %s20, 1
      %p59 = scmp.ne.s32.totalorder %s54, %s56
      %p60 = scmp.eq.s32.totalorder %s20, 0
      %p61 = por %p59, %p60
      %p62 = scmp.ne.s32.totalorder %s54, %s56
      %p63 = scmp.eq.s32.totalorder %s25, 1
      %p64 = por %p62, %p63
      %p65 = scmp.ne.s32.totalorder %s56, %s57
      %p66 = scmp.eq.s32.totalorder %s25, 0
      %p67 = por %p65, %p66
      %p68 = scmp.ne.s32.totalorder %s56, %s57
      %p69 = scmp.eq.s32.totalorder %s26, 1
      %p70 = por %p68, %p69
      %p72 = scmp.ne.s32.totalorder %s57, %s71
      %p73 = scmp.eq.s32.totalorder %s26, 0
      %p74 = por %p72, %p73
      %s76 = sadd.s32 %s75, 1
      %p79 = scmp.eq.s32.totalorder %s20, 1
      %p80 = scmp.ne.s32.totalorder %s75, %s77
      %p81 = scmp.eq.s32.totalorder %s20, 0
      %p82 = por %p80, %p81
      %p83 = scmp.ne.s32.totalorder %s75, %s77
      %p84 = scmp.eq.s32.totalorder %s25, 1
      %p85 = por %p83, %p84
      %p86 = scmp.ne.s32.totalorder %s77, %s78
      %p87 = scmp.eq.s32.totalorder %s25, 0
      %p88 = por %p86, %p87
      %p89 = scmp.ne.s32.totalorder %s77, %s78
      %p90 = scmp.eq.s32.totalorder %s26, 1
      %p91 = por %p89, %p90
      %p93 = scmp.ne.s32.totalorder %s78, %s92
      %p94 = scmp.eq.s32.totalorder %s26, 0
      %p95 = por %p93, %p94
      %s97 = sadd.s32 %s96, 1
      %p100 = scmp.eq.s32.totalorder %s20, 1
      %p101 = scmp.ne.s32.totalorder %s96, %s98
      %p102 = scmp.eq.s32.totalorder %s20, 0
      %p103 = por %p101, %p102
      %p104 = scmp.ne.s32.totalorder %s96, %s98
      %p105 = scmp.eq.s32.totalorder %s25, 1
      %p106 = por %p104, %p105
      %p107 = scmp.ne.s32.totalorder %s98, %s99
      %p108 = scmp.eq.s32.totalorder %s25, 0
      %p109 = por %p107, %p108
      %p110 = scmp.ne.s32.totalorder %s98, %s99
      %p111 = scmp.eq.s32.totalorder %s26, 1
      %p112 = por %p110, %p111
      %p114 = scmp.ne.s32.totalorder %s99, %s113
      %p115 = scmp.eq.s32.totalorder %s26, 0
      %p116 = por %p114, %p115
      %s118 = sadd.s32 %s117, 1
      %p121 = scmp.eq.s32.totalorder %s20, 1
      %p122 = scmp.ne.s32.totalorder %s117, %s119
      %p123 = scmp.eq.s32.totalorder %s20, 0
      %p124 = por %p122, %p123
      %p125 = scmp.ne.s32.totalorder %s117, %s119
      %p126 = scmp.eq.s32.totalorder %s25, 1
      %p127 = por %p125, %p126
      %p128 = scmp.ne.s32.totalorder %s119, %s120
      %p129 = scmp.eq.s32.totalorder %s25, 0
      %p130 = por %p128, %p129
      %p131 = scmp.ne.s32.totalorder %s119, %s120
      %p132 = scmp.eq.s32.totalorder %s26, 1
      %p133 = por %p131, %p132
      %p135 = scmp.ne.s32.totalorder %s120, %s134
      %p136 = scmp.eq.s32.totalorder %s26, 0
      %p137 = por %p135, %p136
      %s139 = sadd.s32 %s138, 1
      %p142 = scmp.eq.s32.totalorder %s20, 1
      %p143 = scmp.ne.s32.totalorder %s138, %s140
      %p144 = scmp.eq.s32.totalorder %s20, 0
      %p145 = por %p143, %p144
      %p146 = scmp.ne.s32.totalorder %s138, %s140
      %p147 = scmp.eq.s32.totalorder %s25, 1
      %p148 = por %p146, %p147
      %p149 = scmp.ne.s32.totalorder %s140, %s141
      %p150 = scmp.eq.s32.totalorder %s25, 0
      %p151 = por %p149, %p150
      %p152 = scmp.ne.s32.totalorder %s140, %s141
      %p153 = scmp.eq.s32.totalorder %s26, 1
      %p154 = por %p152, %p153
      %p156 = scmp.ne.s32.totalorder %s141, %s155
      %p157 = scmp.eq.s32.totalorder %s26, 0
      %p158 = por %p156, %p157
      %s160 = sadd.s32 %s159, 1
      %p163 = scmp.eq.s32.totalorder %s20, 1
      %p164 = scmp.ne.s32.totalorder %s159, %s161
      %p165 = scmp.eq.s32.totalorder %s20, 0
      %p166 = por %p164, %p165
      %p167 = scmp.ne.s32.totalorder %s159, %s161
      %p168 = scmp.eq.s32.totalorder %s25, 1
      %p169 = por %p167, %p168
      %p170 = scmp.ne.s32.totalorder %s161, %s162
      %p171 = scmp.eq.s32.totalorder %s25, 0
      %p172 = por %p170, %p171
      %p173 = scmp.ne.s32.totalorder %s161, %s162
      %p174 = scmp.eq.s32.totalorder %s26, 1
      %p175 = por %p173, %p174
      %p177 = scmp.ne.s32.totalorder %s162, %s176
      %p178 = scmp.eq.s32.totalorder %s26, 0
      %p179 = por %p177, %p178
      %s180 = ssub.s32 %s20, %s27
      %p181 = scmp.eq.s32.totalorder %s180, 0
      %s183 = sadd.s32 %s182, 1
      %s184 = scalar_select %p181, %s182, %s183
      %p187 = pneg %p181
      %p188 = scmp.eq.s32.totalorder %s20, 1
      %p189 = por %p187, %p188
      %p190 = scmp.ne.s32.totalorder %s182, %s185
      %p191 = scmp.eq.s32.totalorder %s20, 0
      %p192 = por %p190, %p191
      %p193 = scmp.ne.s32.totalorder %s182, %s185
      %p194 = scmp.eq.s32.totalorder %s25, 1
      %p195 = por %p193, %p194
      %p196 = scmp.ne.s32.totalorder %s185, %s186
      %p197 = scmp.eq.s32.totalorder %s25, 0
      %p198 = por %p196, %p197
      %p199 = scmp.ne.s32.totalorder %s185, %s186
      %p200 = scmp.eq.s32.totalorder %s26, 1
      %p201 = por %p199, %p200
      %p203 = scmp.ne.s32.totalorder %s186, %s202
      %p204 = scmp.eq.s32.totalorder %s26, 0
      %p205 = por %p203, %p204
      %p206 = scmp.le.s32.totalorder 1, %s20
      %p207 = scmp.lt.s32.totalorder %s20, 3
      %p208 = pnand %p206, %p207
      %p209 = pneg %p208
      // Predicated region
      $region9: #{tpu_custom_call.1} parent=5 // pred_check
        _
      $region10: #{tpu_custom_call.1} parent=5 // pred_check_branch
        %211 = sbr.rel (%p208) target = $region12
      $region11: #{tpu_custom_call.1} parent=5 // pred_region
        %s212 = ssub.s32 %s20, 1
        // Predicated region
        $region13: #{tpu_custom_call.1} parent=11 // pred_check
          %p213 = pneg %p67
        $region14: #{tpu_custom_call.1} parent=11 // pred_check_branch
          %215 = sbr.rel (%p213) target = $region16
        $region15: #{tpu_custom_call.1} parent=11 // pred_region
          %s217 = ssub.s32 1024, 1024
          %218 = vsyncadd [#allocation6], %s217
          %s219 = sshll.u32 [#allocation5], 4
          %s220 = int_to_ptr.vmem [resolvable:$true] %s219
          %225 = dma.hbm_to_vmem [thread:$0]  %s1, 1024, %s220, [#allocation6], 64, 64, 4
        $region16: #{tpu_custom_call.1} parent=11 // pred_fallthru
          _
        // Predicated region
        $region17: #{tpu_custom_call.1} parent=11 // pred_check
          %p226 = pneg %p88
        $region18: #{tpu_custom_call.1} parent=11 // pred_check_branch
          %228 = sbr.rel (%p226) target = $region20
        $region19: #{tpu_custom_call.1} parent=11 // pred_region
          _
        $region20: #{tpu_custom_call.1} parent=11 // pred_fallthru
          _
        // Predicated region
        $region21: #{tpu_custom_call.1} parent=11 // pred_check
          %p229 = pneg %p109
        $region22: #{tpu_custom_call.1} parent=11 // pred_check_branch
          %231 = sbr.rel (%p229) target = $region24
        $region23: #{tpu_custom_call.1} parent=11 // pred_region
          %s233 = ssub.s32 1024, 1024
          %234 = vsyncadd [#allocation6], %s233
          %s235 = sshll.u32 [#allocation7], 4
          %s236 = int_to_ptr.vmem [resolvable:$true] %s235
          %241 = dma.hbm_to_vmem [thread:$0]  %s3, 1024, %s236, [#allocation6], 64, 64, 4
        $region24: #{tpu_custom_call.1} parent=11 // pred_fallthru
          _
        // Predicated region
        $region25: #{tpu_custom_call.1} parent=11 // pred_check
          %p242 = pneg %p130
        $region26: #{tpu_custom_call.1} parent=11 // pred_check_branch
          %244 = sbr.rel (%p242) target = $region28
        $region27: #{tpu_custom_call.1} parent=11 // pred_region
          _
        $region28: #{tpu_custom_call.1} parent=11 // pred_fallthru
          _
        // Predicated region
        $region29: #{tpu_custom_call.1} parent=11 // pred_check
          %p245 = pneg %p151
        $region30: #{tpu_custom_call.1} parent=11 // pred_check_branch
          %247 = sbr.rel (%p245) target = $region32
        $region31: #{tpu_custom_call.1} parent=11 // pred_region
          _
        $region32: #{tpu_custom_call.1} parent=11 // pred_fallthru
          _
        // Predicated region
        $region33: #{tpu_custom_call.1} parent=11 // pred_check
          %p248 = pneg %p172
        $region34: #{tpu_custom_call.1} parent=11 // pred_check_branch
          %250 = sbr.rel (%p248) target = $region36
        $region35: #{tpu_custom_call.1} parent=11 // pred_region
          _
        $region36: #{tpu_custom_call.1} parent=11 // pred_fallthru
          _
      $region12: #{tpu_custom_call.1} parent=5 // pred_fallthru
        _
      %p251 = scmp.lt.s32.totalorder %s20, 2
      // Predicated region
      $region37: #{tpu_custom_call.1} parent=5 // pred_check
        %p252 = pneg %p251
      $region38: #{tpu_custom_call.1} parent=5 // pred_check_branch
        %254 = sbr.rel (%p252) target = $region40
      $region39: #{tpu_custom_call.1} parent=5 // pred_region
        // Predicated region
        $region41: #{tpu_custom_call.1} parent=39 // pred_check
          %p255 = pneg %p40
        $region42: #{tpu_custom_call.1} parent=39 // pred_check_branch
          %257 = sbr.rel (%p255) target = $region44
        $region43: #{tpu_custom_call.1} parent=39 // pred_region
          %s258 = sand.u32 %s30, 1
          %s259 = scalar_lea.sflag [#allocation3], %s258
          %s260 = sand.u32 %s30, 1
          %s261 = smul.addr %s260, 16
          %s262 = scalar_lea.vmem [#allocation2], %s261
          %s263 = smul.u32 2, %s20
          %s265 = ssub.s32 256, 256
          %266 = vsyncadd %s259, %s265
          %s267 = smul.addr %s263, 128
          %s268 = scalar_lea.hbm %s0, %s267
          %s269 = sshll.u32 %s262, 4
          %s270 = int_to_ptr.vmem [resolvable:$true] %s269
          %275 = dma.hbm_to_vmem [thread:$0]  %s268, 256, %s270, %s259, 128, 128, 8
        $region44: #{tpu_custom_call.1} parent=39 // pred_fallthru
          _
      $region40: #{tpu_custom_call.1} parent=5 // pred_fallthru
        _
      %p276 = scmp.le.s32.totalorder 1, %s20
      %p277 = scmp.lt.s32.totalorder %s20, 3
      %p278 = pnand %p276, %p277
      %p279 = pneg %p278
      // Predicated region
      $region45: #{tpu_custom_call.1} parent=5 // pred_check
        _
      $region46: #{tpu_custom_call.1} parent=5 // pred_check_branch
        %281 = sbr.rel (%p278) target = $region48
      $region47: #{tpu_custom_call.1} parent=5 // pred_region
        %s282 = ssub.s32 %s20, 1
        %s283 = sand.u32 %s33, 1
        %s284 = scalar_lea.sflag [#allocation3], %s283
        %s285 = sand.u32 %s33, 1
        %s286 = smul.addr %s285, 16
        %s287 = scalar_lea.vmem [#allocation2], %s286
        // Predicated region
        $region49: #{tpu_custom_call.1} parent=47 // pred_check
          %p288 = pneg %p46
        $region50: #{tpu_custom_call.1} parent=47 // pred_check_branch
          %290 = sbr.rel (%p288) target = $region52
        $region51: #{tpu_custom_call.1} parent=47 // pred_region
          %291 = dma.done %s284, 256
        $region52: #{tpu_custom_call.1} parent=47 // pred_fallthru
          _
        // Predicated region
        $region53: #{tpu_custom_call.1} parent=47 // pred_check
          %p292 = pneg %p67
        $region54: #{tpu_custom_call.1} parent=47 // pred_check_branch
          %294 = sbr.rel (%p292) target = $region56
        $region55: #{tpu_custom_call.1} parent=47 // pred_region
          %295 = dma.done [#allocation6], 1024
        $region56: #{tpu_custom_call.1} parent=47 // pred_fallthru
          _
        // Predicated region
        $region57: #{tpu_custom_call.1} parent=47 // pred_check
          %p296 = pneg %p109
        $region58: #{tpu_custom_call.1} parent=47 // pred_check_branch
          %298 = sbr.rel (%p296) target = $region60
        $region59: #{tpu_custom_call.1} parent=47 // pred_region
          %299 = dma.done [#allocation6], 1024
        $region60: #{tpu_custom_call.1} parent=47 // pred_fallthru
          _
        %s300 = sand.u32 %s33, 1
        %s301 = scalar_lea.sflag [#allocation3], %s300
        %s302 = sand.u32 %s33, 1
        %s303 = smul.addr %s302, 16
        %s304 = scalar_lea.vmem [#allocation2], %s303
        %p305 = pneg %p46
        %p306 = pneg %p43
        %p307 = pneg %p67
        %p308 = pneg %p64
        %p309 = pneg %p88
        %p310 = pneg %p85
        %p311 = pneg %p109
        %p312 = pneg %p106
        %p313 = pneg %p130
        %p314 = pneg %p127
        %p315 = pneg %p151
        %p316 = pneg %p148
        %p317 = pneg %p172
        %p318 = pneg %p169
        %p319 = pneg %p198
        %p320 = pneg %p195
        %s321 = sand.u32 %s185, 1
        %s322 = scalar_lea.sflag [#allocation4], %s321
        %s323 = sand.u32 %s185, 1
        %s324 = smul.addr %s323, 16
        %s325 = scalar_lea.vmem [#allocation8], %s324
        %s326 = smul.u32 2, %s25
        %s327 = smul.u32 2, %s25
        %v329 = vld [vmem:[%s287] sm:$0xff]
        %v330 = vld [vmem:[%s287 + $0x8] sm:$0xff]
        %v331 = vld [vmem:[#allocation5] sm:$0xf]
        %v332 = vld [vmem:[#allocation5 + $0x4] sm:$0xf]
        %v333 = vld [vmem:[#allocation5 + $0x8] sm:$0xf]
        %v334 = vld [vmem:[#allocation5 + $0xc] sm:$0xf]
        %v335 = vld [vmem:[#allocation5 + $0x10] sm:$0xf]
        %v336 = vld [vmem:[#allocation5 + $0x14] sm:$0xf]
        %v337 = vld [vmem:[#allocation5 + $0x18] sm:$0xf]
        %v338 = vld [vmem:[#allocation5 + $0x1c] sm:$0xf]
        %v339 = vld [vmem:[#allocation5 + $0x20] sm:$0xf]
        %v340 = vld [vmem:[#allocation5 + $0x24] sm:$0xf]
        %v341 = vld [vmem:[#allocation5 + $0x28] sm:$0xf]
        %v342 = vld [vmem:[#allocation5 + $0x2c] sm:$0xf]
        %v343 = vld [vmem:[#allocation5 + $0x30] sm:$0xf]
        %v344 = vld [vmem:[#allocation5 + $0x34] sm:$0xf]
        %v345 = vld [vmem:[#allocation5 + $0x38] sm:$0xf]
        %v346 = vld [vmem:[#allocation5 + $0x3c] sm:$0xf]
        %v347 = vld [vmem:[#allocation7] sm:$0xf]
        %v348 = vld [vmem:[#allocation7 + $0x4] sm:$0xf]
        %v349 = vld [vmem:[#allocation7 + $0x8] sm:$0xf]
        %v350 = vld [vmem:[#allocation7 + $0xc] sm:$0xf]
        %v351 = vld [vmem:[#allocation7 + $0x10] sm:$0xf]
        %v352 = vld [vmem:[#allocation7 + $0x14] sm:$0xf]
        %v353 = vld [vmem:[#allocation7 + $0x18] sm:$0xf]
        %v354 = vld [vmem:[#allocation7 + $0x1c] sm:$0xf]
        %v355 = vld [vmem:[#allocation7 + $0x20] sm:$0xf]
        %v356 = vld [vmem:[#allocation7 + $0x24] sm:$0xf]
        %v357 = vld [vmem:[#allocation7 + $0x28] sm:$0xf]
        %v358 = vld [vmem:[#allocation7 + $0x2c] sm:$0xf]
        %v359 = vld [vmem:[#allocation7 + $0x30] sm:$0xf]
        %v360 = vld [vmem:[#allocation7 + $0x34] sm:$0xf]
        %v361 = vld [vmem:[#allocation7 + $0x38] sm:$0xf]
        %v362 = vld [vmem:[#allocation7 + $0x3c] sm:$0xf]
        %v363 = vld [vmem:[%s2] sm:$0x1]
        %v365 = vlaneseq
        %v366 = vshrl.u32 %v365, 7
        %v367 = vsub.s32 0, %v366
        %v368 = vrot.slane %v363, %v367
        %v370 = vld [vmem:[%s4] sm:$0x1]
        %v372 = vlaneseq
        %v373 = vshrl.u32 %v372, 7
        %v374 = vsub.s32 0, %v373
        %v375 = vrot.slane %v370, %v374
        %v377 = vld [vmem:[%s5] sm:$0x1]
        %v379 = vlaneseq
        %v380 = vshrl.u32 %v379, 7
        %v381 = vsub.s32 0, %v380
        %v382 = vrot.slane %v377, %v381
        %v384 = vld [vmem:[%s6] sm:$0x1]
        %v386 = vlaneseq
        %v387 = vshrl.u32 %v386, 7
        %v388 = vsub.s32 0, %v387
        %v389 = vrot.slane %v384, %v388
        %v391 = vlaneseq
        %v392 = vand.u32 %v391, 127
        %vm393 = vcmp.lt.s32.totalorder %v392, 32
        %v394 = vsel %vm393, 1, 0
        %v395 = vcvt.s32.f32 %v394
        %v396 = vpack.c.bf16 %v330, %v329
        %v413 = vunpack.c.l.b16 %v331
        %v414 = vunpack.c.l.b16 %v332
        %v415 = vunpack.c.l.b16 %v333
        %v416 = vunpack.c.l.b16 %v334
        %v417 = vunpack.c.l.b16 %v335
        %v418 = vunpack.c.l.b16 %v336
        %v419 = vunpack.c.l.b16 %v337
        %v420 = vunpack.c.l.b16 %v338
        %v421 = vunpack.c.l.b16 %v339
        %v422 = vunpack.c.l.b16 %v340
        %v423 = vunpack.c.l.b16 %v341
        %v424 = vunpack.c.l.b16 %v342
        %v425 = vunpack.c.l.b16 %v343
        %v426 = vunpack.c.l.b16 %v344
        %v427 = vunpack.c.l.b16 %v345
        %v428 = vunpack.c.l.b16 %v346
        %v429 = vpack.c.b16 %v414, %v413
        %v430 = vpack.c.b16 %v416, %v415
        %v431 = vpack.c.b16 %v418, %v417
        %v432 = vpack.c.b16 %v420, %v419
        %v433 = vpack.c.b16 %v422, %v421
        %v434 = vpack.c.b16 %v424, %v423
        %v435 = vpack.c.b16 %v426, %v425
        %v436 = vpack.c.b16 %v428, %v427
        %445 = vmatprep.subr.bf16.mxu0 0
        %446 = vmatpush1.bf16.msra.mxu0 %v429
        %447 = vmatprep.subr.bf16.mxu0 0
        %448 = vmatpush1.bf16.msra.mxu0 %v430
        %449 = vmatprep.subr.bf16.mxu0 0
        %450 = vmatpush1.bf16.msra.mxu0 %v431
        %451 = vmatprep.subr.bf16.mxu0 0
        %452 = vmatpush1.bf16.msra.mxu0 %v432
        %453 = vmatprep.subr.bf16.mxu0 0
        %454 = vmatpush1.bf16.msra.mxu0 %v433
        %455 = vmatprep.subr.bf16.mxu0 0
        %456 = vmatpush1.bf16.msra.mxu0 %v434
        %457 = vmatprep.subr.bf16.mxu0 0
        %458 = vmatpush1.bf16.msra.mxu0 %v435
        %459 = vmatprep.subr.bf16.mxu0 0
        %460 = vmatpush1.bf16.msra.mxu0 %v436
        %461 = vmatprep.subr.bf16.mxu0 0
        %462 = vmatpush1.bf16.msra.mxu0 0
        %463 = vmatprep.subr.bf16.mxu0 0
        %464 = vmatpush1.bf16.msra.mxu0 0
        %465 = vmatprep.subr.bf16.mxu0 0
        %466 = vmatpush1.bf16.msra.mxu0 0
        %467 = vmatprep.subr.bf16.mxu0 0
        %468 = vmatpush1.bf16.msra.mxu0 0
        %469 = vmatprep.subr.bf16.mxu0 0
        %470 = vmatpush1.bf16.msra.mxu0 0
        %471 = vmatprep.subr.bf16.mxu0 0
        %472 = vmatpush1.bf16.msra.mxu0 0
        %473 = vmatprep.subr.bf16.mxu0 0
        %474 = vmatpush1.bf16.msra.mxu0 0
        %475 = vmatprep.subr.bf16.mxu0 0
        %476 = vmatpush1.bf16.msra.mxu0 0
        %477 = vmatprep.mubr.bf16.mxu0 0
        %478 = vmatmul.mubr.bf16.gmra.mrb[0].mxu0 %v396
        %v479 = vpop.f32.mrb[0].mxu0
        %v480 = vadd.f32 %v368, %v479
        %v481 = vpop.f32.mrb[0].mxu0
        %v482 = vpop.f32.mrb[0].mxu0
        %v483 = vadd.f32 %v368, %v482
        %v484 = vpop.f32.mrb[0].mxu0
        %485 = vdwg.mxu0
        %v486 = vmax.f32 %v480, 0.0
        %v487 = vmax.f32 %v483, 0.0
        %v488 = vpack.c.bf16 %v487, %v486
        %v505 = vunpack.c.l.b16 %v347
        %v506 = vunpack.c.l.b16 %v348
        %v507 = vunpack.c.l.b16 %v349
        %v508 = vunpack.c.l.b16 %v350
        %v509 = vunpack.c.l.b16 %v351
        %v510 = vunpack.c.l.b16 %v352
        %v511 = vunpack.c.l.b16 %v353
        %v512 = vunpack.c.l.b16 %v354
        %v513 = vunpack.c.l.b16 %v355
        %v514 = vunpack.c.l.b16 %v356
        %v515 = vunpack.c.l.b16 %v357
        %v516 = vunpack.c.l.b16 %v358
        %v517 = vunpack.c.l.b16 %v359
        %v518 = vunpack.c.l.b16 %v360
        %v519 = vunpack.c.l.b16 %v361
        %v520 = vunpack.c.l.b16 %v362
        %v521 = vpack.c.b16 %v506, %v505
        %v522 = vpack.c.b16 %v508, %v507
        %v523 = vpack.c.b16 %v510, %v509
        %v524 = vpack.c.b16 %v512, %v511
        %v525 = vpack.c.b16 %v514, %v513
        %v526 = vpack.c.b16 %v516, %v515
        %v527 = vpack.c.b16 %v518, %v517
        %v528 = vpack.c.b16 %v520, %v519
        %537 = vmatprep.subr.bf16.mxu0 0
        %538 = vmatpush1.bf16.msra.mxu0 %v521
        %539 = vmatprep.subr.bf16.mxu0 0
        %540 = vmatpush1.bf16.msra.mxu0 %v522
        %541 = vmatprep.subr.bf16.mxu0 0
        %542 = vmatpush1.bf16.msra.mxu0 %v523
        %543 = vmatprep.subr.bf16.mxu0 0
        %544 = vmatpush1.bf16.msra.mxu0 %v524
        %545 = vmatprep.subr.bf16.mxu0 0
        %546 = vmatpush1.bf16.msra.mxu0 %v525
        %547 = vmatprep.subr.bf16.mxu0 0
        %548 = vmatpush1.bf16.msra.mxu0 %v526
        %549 = vmatprep.subr.bf16.mxu0 0
        %550 = vmatpush1.bf16.msra.mxu0 %v527
        %551 = vmatprep.subr.bf16.mxu0 0
        %552 = vmatpush1.bf16.msra.mxu0 %v528
        %553 = vmatprep.subr.bf16.mxu0 0
        %554 = vmatpush1.bf16.msra.mxu0 0
        %555 = vmatprep.subr.bf16.mxu0 0
        %556 = vmatpush1.bf16.msra.mxu0 0
        %557 = vmatprep.subr.bf16.mxu0 0
        %558 = vmatpush1.bf16.msra.mxu0 0
        %559 = vmatprep.subr.bf16.mxu0 0
        %560 = vmatpush1.bf16.msra.mxu0 0
        %561 = vmatprep.subr.bf16.mxu0 0
        %562 = vmatpush1.bf16.msra.mxu0 0
        %563 = vmatprep.subr.bf16.mxu0 0
        %564 = vmatpush1.bf16.msra.mxu0 0
        %565 = vmatprep.subr.bf16.mxu0 0
        %566 = vmatpush1.bf16.msra.mxu0 0
        %567 = vmatprep.subr.bf16.mxu0 0
        %568 = vmatpush1.bf16.msra.mxu0 0
        %569 = vmatprep.mubr.bf16.mxu0 0
        %570 = vmatmul.mubr.bf16.gmra.mrb[0].mxu0 %v488
        %v571 = vpop.f32.mrb[0].mxu0
        %v572 = vadd.f32 %v375, %v571
        %v573 = vpop.f32.mrb[0].mxu0
        %v574 = vpop.f32.mrb[0].mxu0
        %v575 = vadd.f32 %v375, %v574
        %v576 = vpop.f32.mrb[0].mxu0
        %577 = vdwg.mxu0
        %v578 = vadd.f32 %v572, %v329
        %v579 = vadd.f32 %v575, %v330
        %580 = vadd.xlane.f32.xlu0 %v578
        %v581 = vpop.xlane.xlu0 %580
        %582 = vadd.xlane.f32.xlu0 %v579
        %v583 = vpop.xlane.xlu0 %582
        %v584 = vmul.f32 %v581, 0.03125
        %v585 = vmul.f32 %v583, 0.03125
        %v586 = vsub.f32 %v578, %v584
        %v587 = vsub.f32 %v579, %v585
        %v588 = vmul.f32 %v586, %v395
        %v589 = vmul.f32 %v587, %v395
        %v590 = vmul.f32 %v588, %v588
        %v591 = vmul.f32 %v589, %v589
        %592 = vadd.xlane.f32.xlu0 %v590
        %v593 = vpop.xlane.xlu0 %592
        %594 = vadd.xlane.f32.xlu0 %v591
        %v595 = vpop.xlane.xlu0 %594
        %v596 = vmul.f32 %v593, 0.03125
        %v597 = vmul.f32 %v595, 0.03125
        %v598 = vadd.f32 %v596, 1e-05
        %v599 = vadd.f32 %v597, 1e-05
        %v600 = vrsqrt.pop %v598
        %v601 = vrsqrt.pop %v599
        %v602 = vmul.f32 %v586, %v600
        %v603 = vmul.f32 %v587, %v601
        %v604 = vmul.f32 %v602, %v382
        %v605 = vmul.f32 %v603, %v382
        %v606 = vadd.f32 %v604, %v389
        %v607 = vadd.f32 %v605, %v389
        %v608 = vpack.c.bf16 %v607, %v606
        %609 = vmatprep.subr.bf16.mxu0 0
        %610 = vmatpush1.bf16.msra.mxu0 %v429
        %611 = vmatprep.subr.bf16.mxu0 0
        %612 = vmatpush1.bf16.msra.mxu0 %v430
        %613 = vmatprep.subr.bf16.mxu0 0
        %614 = vmatpush1.bf16.msra.mxu0 %v431
        %615 = vmatprep.subr.bf16.mxu0 0
        %616 = vmatpush1.bf16.msra.mxu0 %v432
        %617 = vmatprep.subr.bf16.mxu0 0
        %618 = vmatpush1.bf16.msra.mxu0 %v433
        %619 = vmatprep.subr.bf16.mxu0 0
        %620 = vmatpush1.bf16.msra.mxu0 %v434
        %621 = vmatprep.subr.bf16.mxu0 0
        %622 = vmatpush1.bf16.msra.mxu0 %v435
        %623 = vmatprep.subr.bf16.mxu0 0
        %624 = vmatpush1.bf16.msra.mxu0 %v436
        %625 = vmatprep.subr.bf16.mxu0 0
        %626 = vmatpush1.bf16.msra.mxu0 0
        %627 = vmatprep.subr.bf16.mxu0 0
        %628 = vmatpush1.bf16.msra.mxu0 0
        %629 = vmatprep.subr.bf16.mxu0 0
        %630 = vmatpush1.bf16.msra.mxu0 0
        %631 = vmatprep.subr.bf16.mxu0 0
        %632 = vmatpush1.bf16.msra.mxu0 0
        %633 = vmatprep.subr.bf16.mxu0 0
        %634 = vmatpush1.bf16.msra.mxu0 0
        %635 = vmatprep.subr.bf16.mxu0 0
        %636 = vmatpush1.bf16.msra.mxu0 0
        %637 = vmatprep.subr.bf16.mxu0 0
        %638 = vmatpush1.bf16.msra.mxu0 0
        %639 = vmatprep.subr.bf16.mxu0 0
        %640 = vmatpush1.bf16.msra.mxu0 0
        %641 = vmatprep.mubr.bf16.mxu0 0
        %642 = vmatmul.mubr.bf16.gmra.mrb[0].mxu0 %v608
        %v643 = vpop.f32.mrb[0].mxu0
        %v644 = vadd.f32 %v368, %v643
        %v645 = vpop.f32.mrb[0].mxu0
        %v646 = vpop.f32.mrb[0].mxu0
        %v647 = vadd.f32 %v368, %v646
        %v648 = vpop.f32.mrb[0].mxu0
        %649 = vdwg.mxu0
        %v650 = vmax.f32 %v644, 0.0
        %v651 = vmax.f32 %v647, 0.0
        %v652 = vpack.c.bf16 %v651, %v650
        %653 = vmatprep.subr.bf16.mxu0 0
        %654 = vmatpush1.bf16.msra.mxu0 %v521
        %655 = vmatprep.subr.bf16.mxu0 0
        %656 = vmatpush1.bf16.msra.mxu0 %v522
        %657 = vmatprep.subr.bf16.mxu0 0
        %658 = vmatpush1.bf16.msra.mxu0 %v523
        %659 = vmatprep.subr.bf16.mxu0 0
        %660 = vmatpush1.bf16.msra.mxu0 %v524
        %661 = vmatprep.subr.bf16.mxu0 0
        %662 = vmatpush1.bf16.msra.mxu0 %v525
        %663 = vmatprep.subr.bf16.mxu0 0
        %664 = vmatpush1.bf16.msra.mxu0 %v526
        %665 = vmatprep.subr.bf16.mxu0 0
        %666 = vmatpush1.bf16.msra.mxu0 %v527
        %667 = vmatprep.subr.bf16.mxu0 0
        %668 = vmatpush1.bf16.msra.mxu0 %v528
        %669 = vmatprep.subr.bf16.mxu0 0
        %670 = vmatpush1.bf16.msra.mxu0 0
        %671 = vmatprep.subr.bf16.mxu0 0
        %672 = vmatpush1.bf16.msra.mxu0 0
        %673 = vmatprep.subr.bf16.mxu0 0
        %674 = vmatpush1.bf16.msra.mxu0 0
        %675 = vmatprep.subr.bf16.mxu0 0
        %676 = vmatpush1.bf16.msra.mxu0 0
        %677 = vmatprep.subr.bf16.mxu0 0
        %678 = vmatpush1.bf16.msra.mxu0 0
        %679 = vmatprep.subr.bf16.mxu0 0
        %680 = vmatpush1.bf16.msra.mxu0 0
        %681 = vmatprep.subr.bf16.mxu0 0
        %682 = vmatpush1.bf16.msra.mxu0 0
        %683 = vmatprep.subr.bf16.mxu0 0
        %684 = vmatpush1.bf16.msra.mxu0 0
        %685 = vmatprep.mubr.bf16.mxu0 0
        %686 = vmatmul.mubr.bf16.gmra.mrb[0].mxu0 %v652
        %v687 = vpop.f32.mrb[0].mxu0
        %v688 = vadd.f32 %v375, %v687
        %v689 = vpop.f32.mrb[0].mxu0
        %v690 = vpop.f32.mrb[0].mxu0
        %v691 = vadd.f32 %v375, %v690
        %v692 = vpop.f32.mrb[0].mxu0
        %693 = vdwg.mxu0
        %v694 = vadd.f32 %v688, %v606
        %v695 = vadd.f32 %v691, %v607
        %696 = vadd.xlane.f32.xlu0 %v694
        %v697 = vpop.xlane.xlu0 %696
        %698 = vadd.xlane.f32.xlu0 %v695
        %v699 = vpop.xlane.xlu0 %698
        %v700 = vmul.f32 %v697, 0.03125
        %v701 = vmul.f32 %v699, 0.03125
        %v702 = vsub.f32 %v694, %v700
        %v703 = vsub.f32 %v695, %v701
        %v704 = vmul.f32 %v702, %v395
        %v705 = vmul.f32 %v703, %v395
        %v706 = vmul.f32 %v704, %v704
        %v707 = vmul.f32 %v705, %v705
        %708 = vadd.xlane.f32.xlu0 %v706
        %v709 = vpop.xlane.xlu0 %708
        %710 = vadd.xlane.f32.xlu0 %v707
        %v711 = vpop.xlane.xlu0 %710
        %v712 = vmul.f32 %v709, 0.03125
        %v713 = vmul.f32 %v711, 0.03125
        %v714 = vadd.f32 %v712, 1e-05
        %v715 = vadd.f32 %v713, 1e-05
        %v716 = vrsqrt.pop %v714
        %v717 = vrsqrt.pop %v715
        %v718 = vmul.f32 %v702, %v716
        %v719 = vmul.f32 %v703, %v717
        %v720 = vmul.f32 %v718, %v382
        %v721 = vmul.f32 %v719, %v382
        %v722 = vadd.f32 %v720, %v389
        %v723 = vadd.f32 %v721, %v389
        %v724 = vxor.u32 %v722, 2147483648
        %v725 = vxor.u32 %v723, 2147483648
        %v726 = vmul.f32 %v724, 1.442695
        %v727 = vpow.pop %v726
        %v728 = vmul.f32 %v725, 1.442695
        %v729 = vpow.pop %v728
        %v730 = vadd.f32 %v727, 1.0
        %v731 = vadd.f32 %v729, 1.0
        %v732 = vrcp.pop %v730
        %v733 = vmul.f32 1.0, %v732
        %v734 = vrcp.pop %v731
        %v735 = vmul.f32 1.0, %v734
        %736 = vst [vmem:[%s325] sm:$0xff] %v733
        %737 = vst [vmem:[%s325 + $0x8] sm:$0xff] %v735
        %s738 = sand.u32 %s185, 1
        %s739 = scalar_lea.sflag [#allocation4], %s738
        %s740 = sand.u32 %s185, 1
        %s741 = smul.addr %s740, 16
        %s742 = scalar_lea.vmem [#allocation8], %s741
        // Predicated region
        $region61: #{tpu_custom_call.1} parent=47 // pred_check
          %p743 = pneg %p195
        $region62: #{tpu_custom_call.1} parent=47 // pred_check_branch
          %745 = sbr.rel (%p743) target = $region64
        $region63: #{tpu_custom_call.1} parent=47 // pred_region
          %s746 = smul.u32 2, %s25
          %s748 = ssub.s32 256, 256
          %749 = vsyncadd %s739, %s748
          %s750 = smul.addr %s746, 128
          %s751 = scalar_lea.hbm %s7, %s750
          %s752 = sshll.u32 %s742, 4
          %s753 = int_to_ptr.vmem [resolvable:$true] %s752
          %758 = dma.vmem_to_hbm [thread:$0]  %s753, 256, %s751, %s739, 128, 128, 8
        $region64: #{tpu_custom_call.1} parent=47 // pred_fallthru
          _
      $region48: #{tpu_custom_call.1} parent=5 // pred_fallthru
        _
      %p759 = scmp.le.s32.totalorder 2, %s20
      // Predicated region
      $region65: #{tpu_custom_call.1} parent=5 // pred_check
        %p760 = pneg %p759
      $region66: #{tpu_custom_call.1} parent=5 // pred_check_branch
        %762 = sbr.rel (%p760) target = $region68
      $region67: #{tpu_custom_call.1} parent=5 // pred_region
        %s763 = ssub.s32 %s20, 2
        // Predicated region
        $region69: #{tpu_custom_call.1} parent=67 // pred_check
          %p764 = pneg %p201
        $region70: #{tpu_custom_call.1} parent=67 // pred_check_branch
          %766 = sbr.rel (%p764) target = $region72
        $region71: #{tpu_custom_call.1} parent=67 // pred_region
          %s767 = sand.u32 %s186, 1
          %s768 = scalar_lea.sflag [#allocation4], %s767
          %s769 = sand.u32 %s186, 1
          %s770 = smul.addr %s769, 16
          %s771 = scalar_lea.vmem [#allocation8], %s770
          %772 = dma.done %s768, 256
        $region72: #{tpu_custom_call.1} parent=67 // pred_fallthru
          _
      $region68: #{tpu_custom_call.1} parent=5 // pred_fallthru
        _
    $region6: #{tpu_custom_call.1} parent=1 // loop_footer
      %s24 = sadd.s32 1, %s20
    $region7: #{tpu_custom_call.1} parent=1 // loop_footer_branch
      %19 = sbr.rel target = $region3
    $region8: #{tpu_custom_call.1} parent=1 // loop_exit
      _
    %773 = vsyncpa [#allocation3], 1
    %s774 = scalar_lea.sflag [#allocation3], 1
    %775 = vsyncpa %s774, 1
    %776 = vsyncpa [#allocation6], 1
    %777 = vsyncpa [#allocation4], 1
    %s778 = scalar_lea.sflag [#allocation4], 1
    %779 = vsyncpa %s778, 1

</llo_original>
